<compile_context>
chip_gen: v5e
topology: v5e:2x2
jax: 0.10.0
libtpu: 0.0.40
codegen_flags: <defaults>
</compile_context>

<pallas_src>
import jax
import jax.numpy as jnp
from jax.experimental import pallas as pl
from jax.experimental.pallas import tpu as pltpu

_LANES = 128
_SUBLANES = 8
_DEFAULT_BUDGET = 16 * 1024 * 1024          # 2 inputs x 2 pipeline buffers
_VMEM_LIMIT = 48 * 1024 * 1024              # <= v7x 64 MiB physical, > v5e 16 MiB default


def _color_loss_kernel(vis_ref, fus_ref, out_ref):
    # Block: (nb, 3, tr, 128) in the HBM dtype (bf16 or f32).
    # Per-channel loads + f32 cast keep the f32 temporaries at 1/3 of the block
    # size each (smaller peak VMEM than materializing the full f32 difference).
    dr = vis_ref[:, 0].astype(jnp.float32) - fus_ref[:, 0].astype(jnp.float32)
    dg = vis_ref[:, 1].astype(jnp.float32) - fus_ref[:, 1].astype(jnp.float32)
    db = vis_ref[:, 2].astype(jnp.float32) - fus_ref[:, 2].astype(jnp.float32)
    # Cb/Cr of the difference (the transform is linear, so
    # cb_vis - cb_fus == cb(vis - fus); same for cr).
    cb = (-0.168736) * dr + (-0.331264) * dg + 0.5 * db
    cr = 0.5 * dr + (-0.418688) * dg + (-0.081312) * db
    v = jnp.abs(cb) + jnp.abs(cr)                        # (nb, tr, 128)
    # Fold everything into a single lane/sublane-resident (8,128) tile with
    # pure VPU adds (tr is a multiple of 8, so the reshape stays tile-aligned).
    nb, tr, _ = v.shape
    v = v.reshape(nb, tr // _SUBLANES, _SUBLANES, _LANES)
    out_ref[...] = jnp.sum(v, axis=(0, 1)).reshape(1, 1, _SUBLANES, _LANES)


def _choose_tiles(N, rows, itemsize, budget_bytes):
    """Pick (nb, tr, gp) for blocks of shape (nb, 3, tr, 128).

    rows is the (unpadded) number of 128-lane rows per image; the row axis is
    later zero-padded to gp * tr rows.  footprint() is exact because the block
    is already lane- (128) and sublane- (8) aligned.
    """
    def footprint(nb, tr):
        return 2 * 2 * nb * 3 * tr * _LANES * itemsize   # 2 inputs x 2 buffers

    # Largest single-image row tile that fits the budget.
    tr_max = (budget_bytes // (2 * 2 * 3 * _LANES * itemsize)) // _SUBLANES * _SUBLANES
    tr_max = max(tr_max, _SUBLANES)

    rows8 = pl.cdiv(rows, _SUBLANES) * _SUBLANES

    if rows8 <= tr_max:
        # Whole (flattened) image fits in one block; pack batch elements.
        tr = rows8
        nb = 1
        for cand in range(N, 0, -1):
            if N % cand == 0 and footprint(cand, tr) <= budget_bytes:
                nb = cand
                break
        gp = 1
        # v7x megacore: never emit a single-step grid if the work can split.
        if (N // nb) * gp == 1:
            if tr >= 2 * _SUBLANES:
                gp = 2
                tr = pl.cdiv(pl.cdiv(rows, 2), _SUBLANES) * _SUBLANES
            elif N > 1:
                for cand in range(N - 1, 0, -1):
                    if N % cand == 0:
                        nb = cand
                        break
    else:
        # Large image: row-tile it; grid always has >= 2 steps here.
        nb = 1
        gp = pl.cdiv(rows, tr_max)
        tr = pl.cdiv(pl.cdiv(rows, gp), _SUBLANES) * _SUBLANES
    return nb, tr, gp


def _flatten_pad(x, rows_total, dtype):
    """(N,3,H,W) -> (N,3,rows_total,128), zero-padded, cast to `dtype`."""
    N, C, H, W = x.shape
    P = H * W
    x = x.astype(dtype).reshape(N, C, P)
    pad = rows_total * _LANES - P
    if pad:
        x = jnp.pad(x, ((0, 0), (0, 0), (0, pad)))
    return x.reshape(N, C, rows_total, _LANES)


def l_color2_pallas(image_visible, image_fused, *, hbm_dtype=jnp.bfloat16,
                    budget_bytes=_DEFAULT_BUDGET):
    """image_*: [N, 3, H, W] (NCHW RGB).  Returns the scalar color loss.

    hbm_dtype controls the dtype streamed from HBM (bf16 halves bandwidth on
    this memory-bound kernel; use jnp.float32 for exact f32 semantics).
    """
    N, C, H, W = image_visible.shape
    assert C == 3, "L_color2 expects RGB inputs (C == 3)."
    assert image_fused.shape == image_visible.shape

    itemsize = jnp.dtype(hbm_dtype).itemsize
    P = H * W
    rows = pl.cdiv(P, _LANES)
    nb, tr, gp = _choose_tiles(N, rows, itemsize, budget_bytes)
    rows_total = gp * tr
    gn = N // nb

    vis = _flatten_pad(image_visible, rows_total, hbm_dtype)
    fus = _flatten_pad(image_fused, rows_total, hbm_dtype)

    in_spec = pl.BlockSpec((nb, 3, tr, _LANES), lambda n, p: (n, 0, p, 0))
    out_spec = pl.BlockSpec((1, 1, _SUBLANES, _LANES), lambda n, p: (n, p, 0, 0))

    padded_pixels = N * rows_total * _LANES
    cost = pl.CostEstimate(
        flops=17 * padded_pixels,
        transcendentals=0,
        bytes_accessed=2 * 3 * padded_pixels * itemsize
        + gn * gp * _SUBLANES * _LANES * 4,
    )

    partial_tiles = pl.pallas_call(
        _color_loss_kernel,
        out_shape=jax.ShapeDtypeStruct((gn, gp, _SUBLANES, _LANES), jnp.float32),
        grid_spec=pltpu.PrefetchScalarGridSpec(
            num_scalar_prefetch=0,
            grid=(gn, gp),
            in_specs=[in_spec, in_spec],
            out_specs=out_spec,
        ),
        compiler_params=pltpu.CompilerParams(
            dimension_semantics=("parallel", "parallel"),
            vmem_limit_bytes=_VMEM_LIMIT,
        ),
        cost_estimate=cost,
    )(vis, fus)

    # Padding contributes |0| + |0| = 0, so summing everything and dividing by
    # the true pixel count reproduces mean|cb| + mean|cr| exactly.
    return jnp.sum(partial_tiles) / jnp.float32(N * H * W)


def _l_color2_reference(image_visible, image_fused):
    """Plain-JAX reference mirroring the PyTorch module (f32)."""
    def to_cbcr(img):
        r, g, b = img[:, 0], img[:, 1], img[:, 2]
        cb = -0.168736 * r - 0.331264 * g + 0.5 * b
        cr = 0.5 * r - 0.418688 * g - 0.081312 * b
        return cb, cr

    cb_v, cr_v = to_cbcr(image_visible)
    cb_f, cr_f = to_cbcr(image_fused)
    return jnp.mean(jnp.abs(cb_v - cb_f)) + jnp.mean(jnp.abs(cr_v - cr_f))


if __name__ == "__main__":
    key = jax.random.PRNGKey(0)
    k1, k2, k3, k4 = jax.random.split(key, 4)

    # Primary test: N=2, C=3, 16x16 images (W << 128 exercises the flatten).
    vis = jax.random.uniform(k1, (2, 3, 16, 16), jnp.float32)
    fus = jax.random.uniform(k2, (2, 3, 16, 16), jnp.float32)

    # f32 HBM path: must match the f32 reference tightly.
    loss_f32 = jax.block_until_ready(l_color2_pallas(vis, fus, hbm_dtype=jnp.float32))
    ref_f32 = jax.block_until_ready(_l_color2_reference(vis, fus))
    assert jnp.allclose(loss_f32, ref_f32, rtol=1e-5, atol=1e-5), (loss_f32, ref_f32)

    # Default bf16 HBM path: compare against the reference evaluated on the
    # same bf16-rounded inputs (kernel accumulates in f32, so this is tight).
    loss_bf16 = jax.block_until_ready(l_color2_pallas(vis, fus))
    vis_bf = vis.astype(jnp.bfloat16).astype(jnp.float32)
    fus_bf = fus.astype(jnp.bfloat16).astype(jnp.float32)
    ref_bf16 = jax.block_until_ready(_l_color2_reference(vis_bf, fus_bf))
    assert jnp.allclose(loss_bf16, ref_bf16, rtol=1e-5, atol=1e-5), (loss_bf16, ref_bf16)
    # Sanity: bf16 rounding error versus the exact f32 loss stays tiny.
    assert jnp.allclose(loss_bf16, ref_f32, rtol=0, atol=5e-3), (loss_bf16, ref_f32)

    # Shape-robustness test: H*W not a multiple of 128 (exercises zero padding
    # and the forced 2-step grid for v7x megacore).
    vis2 = jax.random.uniform(k3, (1, 3, 40, 56), jnp.float32)
    fus2 = jax.random.uniform(k4, (1, 3, 40, 56), jnp.float32)
    loss2 = jax.block_until_ready(l_color2_pallas(vis2, fus2, hbm_dtype=jnp.float32))
    ref2 = jax.block_until_ready(_l_color2_reference(vis2, fus2))
    assert jnp.allclose(loss2, ref2, rtol=1e-5, atol=1e-5), (loss2, ref2)

    print("KERNEL_OK")
</pallas_src>

<mosaic_0001>
module attributes {stable_mosaic.version = 11 : i64} {
  func.func @_color_loss_kernel(%arg0: i32, %arg1: i32, %arg2: memref<1x3x8x128xf32, #tpu.memory_space<vmem>>, %arg3: memref<1x3x8x128xf32, #tpu.memory_space<vmem>>, %arg4: memref<1x1x8x128xf32, #tpu.memory_space<vmem>>) attributes {dimension_semantics = [#tpu.dimension_semantics<parallel>, #tpu.dimension_semantics<parallel>], iteration_bounds = array<i64: 2, 1>, scalar_prefetch = 0 : i64, scratch_operands = 0 : i64, tpu.core_type = #tpu.core_type<tc>, window_params = [{transform_indices = @transform_0, window_bounds = array<i64: 1, 3, 8, 128>}, {transform_indices = @transform_1, window_bounds = array<i64: 1, 3, 8, 128>}, {transform_indices = @transform_2, window_bounds = array<i64: 1, 1, 8, 128>}]} {
    %c0 = arith.constant 0 : index
    %c0_0 = arith.constant 0 : index
    %c0_1 = arith.constant 0 : index
    %c0_2 = arith.constant 0 : index
    %0 = vector.load %arg2[%c0, %c0_0, %c0_1, %c0_2] : memref<1x3x8x128xf32, #tpu.memory_space<vmem>>, vector<1x1x8x128xf32>
    %1 = vector.shape_cast %0 : vector<1x1x8x128xf32> to vector<1x8x128xf32>
    %c0_3 = arith.constant 0 : index
    %c0_4 = arith.constant 0 : index
    %c0_5 = arith.constant 0 : index
    %c0_6 = arith.constant 0 : index
    %2 = vector.load %arg3[%c0_3, %c0_4, %c0_5, %c0_6] : memref<1x3x8x128xf32, #tpu.memory_space<vmem>>, vector<1x1x8x128xf32>
    %3 = vector.shape_cast %2 : vector<1x1x8x128xf32> to vector<1x8x128xf32>
    %4 = arith.subf %1, %3 : vector<1x8x128xf32>
    %c0_7 = arith.constant 0 : index
    %c1 = arith.constant 1 : index
    %c0_8 = arith.constant 0 : index
    %c0_9 = arith.constant 0 : index
    %5 = vector.load %arg2[%c0_7, %c1, %c0_8, %c0_9] : memref<1x3x8x128xf32, #tpu.memory_space<vmem>>, vector<1x1x8x128xf32>
    %6 = vector.shape_cast %5 : vector<1x1x8x128xf32> to vector<1x8x128xf32>
    %c0_10 = arith.constant 0 : index
    %c1_11 = arith.constant 1 : index
    %c0_12 = arith.constant 0 : index
    %c0_13 = arith.constant 0 : index
    %7 = vector.load %arg3[%c0_10, %c1_11, %c0_12, %c0_13] : memref<1x3x8x128xf32, #tpu.memory_space<vmem>>, vector<1x1x8x128xf32>
    %8 = vector.shape_cast %7 : vector<1x1x8x128xf32> to vector<1x8x128xf32>
    %9 = arith.subf %6, %8 : vector<1x8x128xf32>
    %c0_14 = arith.constant 0 : index
    %c2 = arith.constant 2 : index
    %c0_15 = arith.constant 0 : index
    %c0_16 = arith.constant 0 : index
    %10 = vector.load %arg2[%c0_14, %c2, %c0_15, %c0_16] : memref<1x3x8x128xf32, #tpu.memory_space<vmem>>, vector<1x1x8x128xf32>
    %11 = vector.shape_cast %10 : vector<1x1x8x128xf32> to vector<1x8x128xf32>
    %c0_17 = arith.constant 0 : index
    %c2_18 = arith.constant 2 : index
    %c0_19 = arith.constant 0 : index
    %c0_20 = arith.constant 0 : index
    %12 = vector.load %arg3[%c0_17, %c2_18, %c0_19, %c0_20] : memref<1x3x8x128xf32, #tpu.memory_space<vmem>>, vector<1x1x8x128xf32>
    %13 = vector.shape_cast %12 : vector<1x1x8x128xf32> to vector<1x8x128xf32>
    %14 = arith.subf %11, %13 : vector<1x8x128xf32>
    %cst = arith.constant -1.687360e-01 : f32
    %15 = vector.broadcast %cst : f32 to vector<1x8x128xf32>
    %16 = arith.mulf %15, %4 : vector<1x8x128xf32>
    %cst_21 = arith.constant -3.312640e-01 : f32
    %17 = vector.broadcast %cst_21 : f32 to vector<1x8x128xf32>
    %18 = arith.mulf %17, %9 : vector<1x8x128xf32>
    %19 = arith.addf %16, %18 : vector<1x8x128xf32>
    %cst_22 = arith.constant 5.000000e-01 : f32
    %20 = vector.broadcast %cst_22 : f32 to vector<1x8x128xf32>
    %21 = arith.mulf %20, %14 : vector<1x8x128xf32>
    %22 = arith.addf %19, %21 : vector<1x8x128xf32>
    %cst_23 = arith.constant 5.000000e-01 : f32
    %23 = vector.broadcast %cst_23 : f32 to vector<1x8x128xf32>
    %24 = arith.mulf %23, %4 : vector<1x8x128xf32>
    %cst_24 = arith.constant -4.186880e-01 : f32
    %25 = vector.broadcast %cst_24 : f32 to vector<1x8x128xf32>
    %26 = arith.mulf %25, %9 : vector<1x8x128xf32>
    %27 = arith.addf %24, %26 : vector<1x8x128xf32>
    %cst_25 = arith.constant -8.131200e-02 : f32
    %28 = vector.broadcast %cst_25 : f32 to vector<1x8x128xf32>
    %29 = arith.mulf %28, %14 : vector<1x8x128xf32>
    %30 = arith.addf %27, %29 : vector<1x8x128xf32>
    %31 = math.absf %22 : vector<1x8x128xf32>
    %32 = math.absf %30 : vector<1x8x128xf32>
    %33 = arith.addf %31, %32 : vector<1x8x128xf32>
    %34 = vector.shape_cast %33 : vector<1x8x128xf32> to vector<1x1x8x128xf32>
    %cst_26 = arith.constant dense<0.000000e+00> : vector<8x128xf32>
    %35 = vector.multi_reduction <add>, %34, %cst_26 [0, 1] : vector<1x1x8x128xf32> to vector<8x128xf32>
    %36 = vector.shape_cast %35 : vector<8x128xf32> to vector<1x1x8x128xf32>
    %c0_27 = arith.constant 0 : index
    %c0_28 = arith.constant 0 : index
    %c0_29 = arith.constant 0 : index
    %c0_30 = arith.constant 0 : index
    %37 = vector.load %arg4[%c0_27, %c0_28, %c0_29, %c0_30] : memref<1x1x8x128xf32, #tpu.memory_space<vmem>>, vector<1x1x8x128xf32>
    tpu.vector_store %arg4[%c0_27, %c0_28, %c0_29, %c0_30], %36 {strides = array<i32>} : memref<1x1x8x128xf32, #tpu.memory_space<vmem>>, vector<1x1x8x128xf32>,
    return
  }
  func.func @transform_0(%arg0: i32, %arg1: i32) -> (i32, i32, i32, i32) {
    %c0_i32 = arith.constant 0 : i32
    %c0_i32_0 = arith.constant 0 : i32
    %c0_i32_1 = arith.constant 0 : i32
    return %arg0, %c0_i32, %arg1, %c0_i32_0 : i32, i32, i32, i32
  }
  func.func @transform_1(%arg0: i32, %arg1: i32) -> (i32, i32, i32, i32) {
    %c0_i32 = arith.constant 0 : i32
    %c0_i32_0 = arith.constant 0 : i32
    %c0_i32_1 = arith.constant 0 : i32
    return %arg0, %c0_i32, %arg1, %c0_i32_0 : i32, i32, i32, i32
  }
  func.func @transform_2(%arg0: i32, %arg1: i32) -> (i32, i32, i32, i32) {
    %c0_i32 = arith.constant 0 : i32
    %c0_i32_0 = arith.constant 0 : i32
    %c0_i32_1 = arith.constant 0 : i32
    return %arg0, %arg1, %c0_i32, %c0_i32_0 : i32, i32, i32, i32
  }
}

</mosaic_0001>

<llo_original>
// kernel: tpu_custom_call.1
$region0: #{tpu_custom_call.1}
  #allocation0 [shape = 'u32[]', space=smem, size = 0x4, offset = 0x4, fixed_abs, tag = 'smem constant byte address 0x4 - core index']
  #allocation1 [shape = 'u32[72,128]{1,0:T(1,128)}', space=vmem, size = 0x9000, scoped, tag = 'internal scratch']
  %s0 = inlined_call_operand.hbm [shape: f32[2,3,8,128], index: 0, kind: input, shape index: {}]
  %s1 = inlined_call_operand.hbm [shape: f32[2,3,8,128], index: 1, kind: input, shape index: {}]
  %s2 = inlined_call_operand.hbm [shape: f32[2,1,8,128], index: 2, kind: output, shape index: {}]
  %s3 = sld [smem:[#allocation0]]
  $region49: #{tpu_custom_call.1} parent=0
    _
  %s5 = ssub.s32 1, %s3
  %s6 = scalar_select 0, %s5, %s3
  $region1: #{tpu_custom_call.1} parent=0
    #allocation2 [shape = 'u8[24576]{0}', space=vmem, size = 0x6000, scoped, tag = 'input window, operand 0']
    #allocation3 [shape = 's32[2]{0}', space=sflag, size = 0x8, scoped, tag = 'scoped memory for tpu_custom_call.1']
    #allocation4 [shape = 's32[2]{0}', space=sflag, size = 0x8, scoped, tag = 'scoped memory for tpu_custom_call.1']
    #allocation5 [shape = 'u8[24576]{0}', space=vmem, size = 0x6000, scoped, tag = 'input window, operand 1']
    #allocation6 [shape = 's32[2]{0}', space=sflag, size = 0x8, scoped, tag = 'scoped memory for tpu_custom_call.1']
    #allocation7 [shape = 'u8[8192]{0}', space=vmem, size = 0x2000, scoped, tag = 'output window, operand 0']
    %7 = vsyncpa [#allocation3], 0
    %s8 = scalar_lea.sflag [#allocation3], 1
    %9 = vsyncpa %s8, 0
    %10 = vsyncpa [#allocation6], 0
    %s11 = scalar_lea.sflag [#allocation6], 1
    %12 = vsyncpa %s11, 0
    %13 = vsyncpa [#allocation4], 0
    %s14 = scalar_lea.sflag [#allocation4], 1
    %15 = vsyncpa %s14, 0
    loop: start=0, step=1, limit=4
    $region2: #{tpu_custom_call.1} parent=1 // loop_pre_header
      _
    $region3: #{tpu_custom_call.1} parent=1 // loop_header
      %s17 = sphi 0, %s21
      %p18 = scmp.ge.s32.totalorder %s17, 4
      %s24 = sphi 0, %s36
      %s25 = sphi 0, %s32
      %s26 = sphi 0, %s24
      %s27 = sphi 0, %s25
      %s28 = sphi 0, %s26
      %s29 = sphi 0, %s27
      %s41 = sphi 0, %s43
      %s44 = sphi 0, %s41
      %s45 = sphi 0, %s44
      %s61 = sphi 0, %s45
      %s69 = sphi 0, %s71
      %s72 = sphi 0, %s69
      %s73 = sphi 0, %s72
      %s89 = sphi 0, %s73
      %s97 = sphi 0, %s99
      %s100 = sphi 0, %s97
      %s101 = sphi 0, %s100
      %s117 = sphi 0, %s101
    $region4: #{tpu_custom_call.1} parent=1 // loop_header_branch
      %20 = sbr.rel (%p18) target = $region8
    $region5: #{tpu_custom_call.1} parent=1 // loop_body
      %s22 = ssub.s32 %s17, 1
      %s23 = ssub.s32 %s17, 2
      %s30 = sadd.s32 1, %s25
      %p31 = scmp.ge.s32.totalorder %s30, 1
      %s32 = scalar_select %p31, 0, %s30
      %s33 = sadd.s32 1, %s24
      %s34 = scalar_select %p31, %s33, %s24
      %p35 = scmp.ge.s32.totalorder %s34, 2
      %s36 = scalar_select %p35, 0, %s34
      %s37 = ssub.s32 %s24, %s36
      %s38 = ssub.s32 %s25, %s32
      %s39 = sor.u32 %s37, %s38
      %p40 = scmp.eq.s32.totalorder %s39, 0
      %s42 = sadd.s32 %s41, 1
      %s43 = scalar_select %p40, %s41, %s42
      %p46 = pneg %p40
      %p47 = scmp.eq.s32.totalorder %s17, 1
      %p48 = por %p46, %p47
      %p49 = scmp.ne.s32.totalorder %s41, %s44
      %p50 = scmp.eq.s32.totalorder %s17, 0
      %p51 = por %p49, %p50
      %p52 = scmp.ne.s32.totalorder %s41, %s44
      %p53 = scmp.eq.s32.totalorder %s22, 1
      %p54 = por %p52, %p53
      %p55 = scmp.ne.s32.totalorder %s44, %s45
      %p56 = scmp.eq.s32.totalorder %s22, 0
      %p57 = por %p55, %p56
      %p58 = scmp.ne.s32.totalorder %s44, %s45
      %p59 = scmp.eq.s32.totalorder %s23, 1
      %p60 = por %p58, %p59
      %p62 = scmp.ne.s32.totalorder %s45, %s61
      %p63 = scmp.eq.s32.totalorder %s23, 0
      %p64 = por %p62, %p63
      %s65 = ssub.s32 %s24, %s36
      %s66 = ssub.s32 %s25, %s32
      %s67 = sor.u32 %s65, %s66
      %p68 = scmp.eq.s32.totalorder %s67, 0
      %s70 = sadd.s32 %s69, 1
      %s71 = scalar_select %p68, %s69, %s70
      %p74 = pneg %p68
      %p75 = scmp.eq.s32.totalorder %s17, 1
      %p76 = por %p74, %p75
      %p77 = scmp.ne.s32.totalorder %s69, %s72
      %p78 = scmp.eq.s32.totalorder %s17, 0
      %p79 = por %p77, %p78
      %p80 = scmp.ne.s32.totalorder %s69, %s72
      %p81 = scmp.eq.s32.totalorder %s22, 1
      %p82 = por %p80, %p81
      %p83 = scmp.ne.s32.totalorder %s72, %s73
      %p84 = scmp.eq.s32.totalorder %s22, 0
      %p85 = por %p83, %p84
      %p86 = scmp.ne.s32.totalorder %s72, %s73
      %p87 = scmp.eq.s32.totalorder %s23, 1
      %p88 = por %p86, %p87
      %p90 = scmp.ne.s32.totalorder %s73, %s89
      %p91 = scmp.eq.s32.totalorder %s23, 0
      %p92 = por %p90, %p91
      %s93 = ssub.s32 %s24, %s36
      %s94 = ssub.s32 %s25, %s32
      %s95 = sor.u32 %s93, %s94
      %p96 = scmp.eq.s32.totalorder %s95, 0
      %s98 = sadd.s32 %s97, 1
      %s99 = scalar_select %p96, %s97, %s98
      %p102 = pneg %p96
      %p103 = scmp.eq.s32.totalorder %s17, 1
      %p104 = por %p102, %p103
      %p105 = scmp.ne.s32.totalorder %s97, %s100
      %p106 = scmp.eq.s32.totalorder %s17, 0
      %p107 = por %p105, %p106
      %p108 = scmp.ne.s32.totalorder %s97, %s100
      %p109 = scmp.eq.s32.totalorder %s22, 1
      %p110 = por %p108, %p109
      %p111 = scmp.ne.s32.totalorder %s100, %s101
      %p112 = scmp.eq.s32.totalorder %s22, 0
      %p113 = por %p111, %p112
      %p114 = scmp.ne.s32.totalorder %s100, %s101
      %p115 = scmp.eq.s32.totalorder %s23, 1
      %p116 = por %p114, %p115
      %p118 = scmp.ne.s32.totalorder %s101, %s117
      %p119 = scmp.eq.s32.totalorder %s23, 0
      %p120 = por %p118, %p119
      %p121 = scmp.le.s32.totalorder 1, %s17
      %p122 = scmp.lt.s32.totalorder %s17, 3
      %p123 = pnand %p121, %p122
      %p124 = pneg %p123
      // Predicated region
      $region9: #{tpu_custom_call.1} parent=5 // pred_check
        _
      $region10: #{tpu_custom_call.1} parent=5 // pred_check_branch
        %126 = sbr.rel (%p123) target = $region12
      $region11: #{tpu_custom_call.1} parent=5 // pred_region
        %s127 = ssub.s32 %s17, 1
      $region12: #{tpu_custom_call.1} parent=5 // pred_fallthru
        _
      %p128 = scmp.lt.s32.totalorder %s17, 2
      // Predicated region
      $region13: #{tpu_custom_call.1} parent=5 // pred_check
        %p129 = pneg %p128
      $region14: #{tpu_custom_call.1} parent=5 // pred_check_branch
        %131 = sbr.rel (%p129) target = $region16
      $region15: #{tpu_custom_call.1} parent=5 // pred_region
        // Predicated region
        $region17: #{tpu_custom_call.1} parent=15 // pred_check
          %p132 = pneg %p51
        $region18: #{tpu_custom_call.1} parent=15 // pred_check_branch
          %134 = sbr.rel (%p132) target = $region20
        $region19: #{tpu_custom_call.1} parent=15 // pred_region
          %s135 = sand.u32 %s41, 1
          %s136 = scalar_lea.sflag [#allocation3], %s135
          %s137 = sand.u32 %s41, 1
          %s138 = smul.addr %s137, 24
          %s139 = scalar_lea.vmem [#allocation2], %s138
          %141 = vsyncadd %s136, 0
          %s142 = smul.addr %s24, 3
          %s143 = sadd.s32 %s25, %s142
          %s144 = smul.addr %s143, 8
          %s145 = scalar_lea.hbm %s0, %s144
          %s146 = sshll.u32 %s145, 4
          %s147 = int_to_ptr.hbm [resolvable:$true] %s146
          %s148 = sshll.u32 %s139, 4
          %s149 = int_to_ptr.vmem [resolvable:$true] %s148
          %154 = dma.hbm_to_vmem [thread:$0]  %s147, 384, %s149, %s136, 128, 128, 8
        $region20: #{tpu_custom_call.1} parent=15 // pred_fallthru
          _
        // Predicated region
        $region21: #{tpu_custom_call.1} parent=15 // pred_check
          %p155 = pneg %p79
        $region22: #{tpu_custom_call.1} parent=15 // pred_check_branch
          %157 = sbr.rel (%p155) target = $region24
        $region23: #{tpu_custom_call.1} parent=15 // pred_region
          %s158 = sand.u32 %s69, 1
          %s159 = scalar_lea.sflag [#allocation6], %s158
          %s160 = sand.u32 %s69, 1
          %s161 = smul.addr %s160, 24
          %s162 = scalar_lea.vmem [#allocation5], %s161
          %164 = vsyncadd %s159, 0
          %s165 = smul.addr %s24, 3
          %s166 = sadd.s32 %s25, %s165
          %s167 = smul.addr %s166, 8
          %s168 = scalar_lea.hbm %s1, %s167
          %s169 = sshll.u32 %s168, 4
          %s170 = int_to_ptr.hbm [resolvable:$true] %s169
          %s171 = sshll.u32 %s162, 4
          %s172 = int_to_ptr.vmem [resolvable:$true] %s171
          %177 = dma.hbm_to_vmem [thread:$0]  %s170, 384, %s172, %s159, 128, 128, 8
        $region24: #{tpu_custom_call.1} parent=15 // pred_fallthru
          _
      $region16: #{tpu_custom_call.1} parent=5 // pred_fallthru
        _
      %p178 = scmp.le.s32.totalorder 1, %s17
      %p179 = scmp.lt.s32.totalorder %s17, 3
      %p180 = pnand %p178, %p179
      %p181 = pneg %p180
      // Predicated region
      $region25: #{tpu_custom_call.1} parent=5 // pred_check
        _
      $region26: #{tpu_custom_call.1} parent=5 // pred_check_branch
        %183 = sbr.rel (%p180) target = $region28
      $region27: #{tpu_custom_call.1} parent=5 // pred_region
        %s184 = ssub.s32 %s17, 1
        %s185 = sand.u32 %s44, 1
        %s186 = scalar_lea.sflag [#allocation3], %s185
        %s187 = sand.u32 %s44, 1
        %s188 = smul.addr %s187, 24
        %s189 = scalar_lea.vmem [#allocation2], %s188
        // Predicated region
        $region29: #{tpu_custom_call.1} parent=27 // pred_check
          %p190 = pneg %p57
        $region30: #{tpu_custom_call.1} parent=27 // pred_check_branch
          %192 = sbr.rel (%p190) target = $region32
        $region31: #{tpu_custom_call.1} parent=27 // pred_region
          %194 = dma.done %s186, 384
        $region32: #{tpu_custom_call.1} parent=27 // pred_fallthru
          _
        %s195 = sand.u32 %s72, 1
        %s196 = scalar_lea.sflag [#allocation6], %s195
        %s197 = sand.u32 %s72, 1
        %s198 = smul.addr %s197, 24
        %s199 = scalar_lea.vmem [#allocation5], %s198
        // Predicated region
        $region33: #{tpu_custom_call.1} parent=27 // pred_check
          %p200 = pneg %p85
        $region34: #{tpu_custom_call.1} parent=27 // pred_check_branch
          %202 = sbr.rel (%p200) target = $region36
        $region35: #{tpu_custom_call.1} parent=27 // pred_region
          %204 = dma.done %s196, 384
        $region36: #{tpu_custom_call.1} parent=27 // pred_fallthru
          _
        %s205 = sand.u32 %s44, 1
        %s206 = scalar_lea.sflag [#allocation3], %s205
        %s207 = sand.u32 %s44, 1
        %s208 = smul.addr %s207, 24
        %s209 = scalar_lea.vmem [#allocation2], %s208
        %p210 = pneg %p57
        %p211 = pneg %p54
        %s212 = sand.u32 %s72, 1
        %s213 = scalar_lea.sflag [#allocation6], %s212
        %s214 = sand.u32 %s72, 1
        %s215 = smul.addr %s214, 24
        %s216 = scalar_lea.vmem [#allocation5], %s215
        %p217 = pneg %p85
        %p218 = pneg %p82
        %p219 = pneg %p113
        %p220 = pneg %p110
        %s221 = sand.u32 %s100, 1
        %s222 = scalar_lea.sflag [#allocation4], %s221
        %s223 = sand.u32 %s100, 1
        %s224 = smul.addr %s223, 8
        %s225 = scalar_lea.vmem [#allocation7], %s224
        %v226 = vld [vmem:[%s189] sm:$0xff]
        %v227 = vld [vmem:[%s199] sm:$0xff]
        %v228 = vsub.f32 %v226, %v227
        %s229 = scalar_lea.vmem %s189, 8 [#allocation2]
        %v230 = vld [vmem:[%s229] sm:$0xff]
        %s231 = scalar_lea.vmem %s199, 8 [#allocation5]
        %v232 = vld [vmem:[%s231] sm:$0xff]
        %v233 = vsub.f32 %v230, %v232
        %s234 = scalar_lea.vmem %s189, 16 [#allocation2]
        %v235 = vld [vmem:[%s234] sm:$0xff]
        %s236 = scalar_lea.vmem %s199, 16 [#allocation5]
        %v237 = vld [vmem:[%s236] sm:$0xff]
        %v238 = vsub.f32 %v235, %v237
        %v239 = vmul.f32 %v228, -0.168736
        %v240 = vmul.f32 %v233, -0.331264
        %v241 = vadd.f32 %v239, %v240
        %v242 = vmul.f32 %v238, 0.5
        %v243 = vadd.f32 %v241, %v242
        %v244 = vmul.f32 %v228, 0.5
        %v245 = vmul.f32 %v233, -0.418688
        %v246 = vadd.f32 %v244, %v245
        %v247 = vmul.f32 %v238, -0.081312
        %v248 = vadd.f32 %v246, %v247
        %v249 = vand.u32 2147483647, %v243
        %v250 = vand.u32 2147483647, %v248
        %v251 = vadd.f32 %v249, %v250
        %v252 = vadd.f32 %v251, 0.0
        %253 = vst [vmem:[%s225] sm:$0xff] %v252
        %s254 = sand.u32 %s100, 1
        %s255 = scalar_lea.sflag [#allocation4], %s254
        %s256 = sand.u32 %s100, 1
        %s257 = smul.addr %s256, 8
        %s258 = scalar_lea.vmem [#allocation7], %s257
        // Predicated region
        $region37: #{tpu_custom_call.1} parent=27 // pred_check
          %p259 = pneg %p110
        $region38: #{tpu_custom_call.1} parent=27 // pred_check_branch
          %261 = sbr.rel (%p259) target = $region40
        $region39: #{tpu_custom_call.1} parent=27 // pred_region
          %263 = vsyncadd %s255, 0
          %s264 = sadd.s32 %s27, %s26
          %s265 = smul.addr %s264, 8
          %s266 = scalar_lea.hbm %s2, %s265
          %s268 = sshll.u32 %s258, 4
          %s269 = int_to_ptr.vmem [resolvable:$true] %s268
          %s270 = sshll.u32 %s266, 4
          %s271 = int_to_ptr.hbm [resolvable:$true] %s270
          %273 = dma.vmem_to_hbm [thread:$0]  %s269, 128, %s271, %s255
        $region40: #{tpu_custom_call.1} parent=27 // pred_fallthru
          _
      $region28: #{tpu_custom_call.1} parent=5 // pred_fallthru
        _
      %p274 = scmp.le.s32.totalorder 2, %s17
      // Predicated region
      $region41: #{tpu_custom_call.1} parent=5 // pred_check
        %p275 = pneg %p274
      $region42: #{tpu_custom_call.1} parent=5 // pred_check_branch
        %277 = sbr.rel (%p275) target = $region44
      $region43: #{tpu_custom_call.1} parent=5 // pred_region
        %s278 = ssub.s32 %s17, 2
        // Predicated region
        $region45: #{tpu_custom_call.1} parent=43 // pred_check
          %p279 = pneg %p116
        $region46: #{tpu_custom_call.1} parent=43 // pred_check_branch
          %281 = sbr.rel (%p279) target = $region48
        $region47: #{tpu_custom_call.1} parent=43 // pred_region
          %s282 = sand.u32 %s101, 1
          %s283 = scalar_lea.sflag [#allocation4], %s282
          %s284 = sand.u32 %s101, 1
          %s285 = smul.addr %s284, 8
          %s286 = scalar_lea.vmem [#allocation7], %s285
          %288 = dma.done %s283, 128
        $region48: #{tpu_custom_call.1} parent=43 // pred_fallthru
          _
      $region44: #{tpu_custom_call.1} parent=5 // pred_fallthru
        _
    $region6: #{tpu_custom_call.1} parent=1 // loop_footer
      %s21 = sadd.s32 1, %s17
    $region7: #{tpu_custom_call.1} parent=1 // loop_footer_branch
      %16 = sbr.rel target = $region3
    $region8: #{tpu_custom_call.1} parent=1 // loop_exit
      _
    %289 = vsyncpa [#allocation3], 1
    %s290 = scalar_lea.sflag [#allocation3], 1
    %291 = vsyncpa %s290, 1
    %292 = vsyncpa [#allocation6], 1
    %s293 = scalar_lea.sflag [#allocation6], 1
    %294 = vsyncpa %s293, 1
    %295 = vsyncpa [#allocation4], 1
    %s296 = scalar_lea.sflag [#allocation4], 1
    %297 = vsyncpa %s296, 1

</llo_original>
